<compile_context>
chip_gen: v6e
topology: v6e:2x2x1
jax: 0.10.0
libtpu: 0.0.40
codegen_flags: <defaults>
</compile_context>

<pallas_src>
import functools

import jax
import jax.numpy as jnp
from jax import lax
from jax.experimental import pallas as pl
from jax.experimental.pallas import tpu as pltpu


def _emb_gather_kernel(ids_ref, emb_hbm, out_ref, gather_buf, sems, *, tile_tokens):
    """Gather `tile_tokens` embedding rows from HBM into a dense (T, D) block.

    ids_ref:    SMEM (n_pad,) int32 flat token ids (scalar prefetch)
    emb_hbm:    HBM  (V, D) embedding table (memory_space=pl.ANY, manual DMA)
    out_ref:    VMEM (T, D) output tile
    gather_buf: VMEM (T, D) scratch gather buffer
    sems:       DMA semaphores, one per in-flight row copy
    """
    step = pl.program_id(0)
    base = step * tile_tokens

    # Issue all T row gathers (keeps T small DMAs in flight before any wait).
    def issue(t, carry):
        idx = ids_ref[base + t]
        pltpu.make_async_copy(emb_hbm.at[idx], gather_buf.at[t], sems.at[t]).start()
        return carry

    lax.fori_loop(0, tile_tokens, issue, 0)

    # Wait for all of them (source slice is irrelevant for wait; shapes match).
    def wait(t, carry):
        pltpu.make_async_copy(emb_hbm.at[0], gather_buf.at[t], sems.at[t]).wait()
        return carry

    lax.fori_loop(0, tile_tokens, wait, 0)

    # Single dense, unmasked (T, D) store into the output block.
    out_ref[...] = gather_buf[...]


def encoder_forward(src_seq, src_mask, emb_table, *, pad_idx, tile_tokens=256):
    """Pallas equivalent of Encoder.forward (src_mask is unused, as in PyTorch)."""
    del src_mask  # unused by the reference forward pass
    B, L = src_seq.shape
    V, D = emb_table.shape
    n_tok = B * L

    # Sublane-dense token tile: multiple of 8 (f32), capped at `tile_tokens`,
    # and no larger than needed for small problems.
    t = min(tile_tokens, max(8, ((n_tok + 7) // 8) * 8))
    t = ((t + 7) // 8) * 8
    n_pad = ((n_tok + t - 1) // t) * t

    flat_ids = src_seq.reshape(-1).astype(jnp.int32)
    if n_pad != n_tok:
        # pad with pad_idx (always a valid row) so padded gathers stay in-bounds
        flat_ids = jnp.pad(flat_ids, (0, n_pad - n_tok), constant_values=pad_idx)

    kernel = functools.partial(_emb_gather_kernel, tile_tokens=t)

    out_flat = pl.pallas_call(
        kernel,
        out_shape=jax.ShapeDtypeStruct((n_pad, D), emb_table.dtype),
        grid_spec=pltpu.PrefetchScalarGridSpec(
            num_scalar_prefetch=1,
            grid=(n_pad // t,),
            in_specs=[
                # Embedding table stays in HBM; rows are gathered manually, so
                # the kernel scales to vocabularies that don't fit VMEM
                # (64 MiB on v7x, 128 MiB on v5e/v6e).
                pl.BlockSpec(memory_space=pl.ANY),
            ],
            out_specs=pl.BlockSpec((t, D), lambda i, ids: (i, 0)),
            scratch_shapes=[
                pltpu.VMEM((t, D), emb_table.dtype),
                pltpu.SemaphoreType.DMA((t,)),
            ],
        ),
        compiler_params=pltpu.CompilerParams(
            # Independent token tiles -> shard across v7x's 2 TensorCores.
            dimension_semantics=("parallel",),
        ),
    )(flat_ids, emb_table)

    return out_flat[:n_tok].reshape(B, L, D)


def init_encoder_params(key, n_src_vocab, d_word_vec, pad_idx):
    """Deterministic synthetic init mirroring nn.Embedding (N(0,1), zero pad row)."""
    emb = jax.random.normal(key, (n_src_vocab, d_word_vec), dtype=jnp.float32)
    emb = emb.at[pad_idx].set(0.0)
    return emb


if __name__ == "__main__":
    # Small shapes consistent with the module's forward.
    n_src_vocab = 64
    pad_idx = 0
    d_word_vec = 128   # = d_model (lane-dense last dim)
    B, L = 2, 8

    key = jax.random.PRNGKey(0)
    k_emb, k_seq = jax.random.split(key)

    emb_table = init_encoder_params(k_emb, n_src_vocab, d_word_vec, pad_idx)

    src_seq = jax.random.randint(k_seq, (B, L), 0, n_src_vocab, dtype=jnp.int32)
    # sprinkle in some padding tokens
    src_seq = src_seq.at[:, -2:].set(pad_idx)
    src_mask = (src_seq != pad_idx)  # unused by forward, passed for API parity

    enc_output = encoder_forward(src_seq, src_mask, emb_table, pad_idx=pad_idx)
    enc_output = jax.block_until_ready(enc_output)

    # Correctness check against the pure-JAX reference (embedding gather).
    ref = jnp.take(emb_table, src_seq, axis=0)
    assert enc_output.shape == (B, L, d_word_vec), enc_output.shape
    assert jnp.allclose(enc_output, ref), "mismatch vs reference embedding lookup"

    print("KERNEL_OK")
</pallas_src>

<mosaic_0001>
module attributes {stable_mosaic.version = 11 : i64} {
  func.func @_emb_gather_kernel(%arg0: i32, %arg1: memref<16xi32, #tpu.memory_space<smem>>, %arg2: memref<64x128xf32, #tpu.memory_space<any>>, %arg3: memref<16x128xf32, #tpu.memory_space<vmem>>, %arg4: memref<16x128xf32, #tpu.memory_space<vmem>>, %arg5: memref<16x!tpu.dma_semaphore, #tpu.memory_space<semaphore_mem>>) attributes {dimension_semantics = [#tpu.dimension_semantics<parallel>], iteration_bounds = array<i64: 1>, scalar_prefetch = 1 : i64, scratch_operands = 2 : i64, tpu.core_type = #tpu.core_type<tc>, window_params = [{}, {transform_indices = @transform_1, window_bounds = array<i64: 16, 128>}]} {
    %c16_i32 = arith.constant 16 : i32
    %0 = arith.muli %arg0, %c16_i32 : i32
    %c0_i32 = arith.constant 0 : i32
    %c16_i32_0 = arith.constant 16 : i32
    %1 = arith.addi %c0_i32, %c16_i32_0 : i32
    %c1_i32 = arith.constant 1 : i32
    scf.for %arg6 = %c0_i32 to %1 step %c1_i32  : i32 {
      %5 = arith.addi %0, %arg6 : i32
      %6 = arith.index_cast %5 : i32 to index
      %7 = memref.load %arg1[%6] : memref<16xi32, #tpu.memory_space<smem>>
      %c0_i32_9 = arith.constant 0 : i32
      %8 = tpu.memref_slice %arg2[%7, %c0_i32_9] : memref<64x128xf32, #tpu.memory_space<any>> -> memref<1x128xf32, #tpu.memory_space<any>>
      %9 = tpu.memref_squeeze %8 : memref<1x128xf32, #tpu.memory_space<any>> -> memref<128xf32, #tpu.memory_space<any>>
      %c0_i32_10 = arith.constant 0 : i32
      %10 = tpu.memref_slice %arg4[%arg6, %c0_i32_10] : memref<16x128xf32, #tpu.memory_space<vmem>> -> memref<1x128xf32, #tpu.memory_space<vmem>>
      %11 = tpu.memref_squeeze %10 : memref<1x128xf32, #tpu.memory_space<vmem>> -> memref<128xf32, #tpu.memory_space<vmem>>
      %12 = tpu.memref_slice %arg5[%arg6] : memref<16x!tpu.dma_semaphore, #tpu.memory_space<semaphore_mem>> -> memref<1x!tpu.dma_semaphore, #tpu.memory_space<semaphore_mem>>
      %13 = tpu.memref_squeeze %12 : memref<1x!tpu.dma_semaphore, #tpu.memory_space<semaphore_mem>> -> memref<!tpu.dma_semaphore, #tpu.memory_space<semaphore_mem>>
      tpu.enqueue_dma source(%9 : memref<128xf32, #tpu.memory_space<any>>) target(%11 : memref<128xf32, #tpu.memory_space<vmem>>) target_semaphore(%13 : memref<!tpu.dma_semaphore, #tpu.memory_space<semaphore_mem>>)
    }
    %c16_i32_1 = arith.constant 16 : i32
    %c0_i32_2 = arith.constant 0 : i32
    %c16_i32_3 = arith.constant 16 : i32
    %2 = arith.addi %c0_i32_2, %c16_i32_3 : i32
    %c1_i32_4 = arith.constant 1 : i32
    scf.for %arg6 = %c0_i32_2 to %2 step %c1_i32_4  : i32 {
      %c0_i32_9 = arith.constant 0 : i32
      %c0_i32_10 = arith.constant 0 : i32
      %5 = tpu.memref_slice %arg2[%c0_i32_9, %c0_i32_10] : memref<64x128xf32, #tpu.memory_space<any>> -> memref<1x128xf32, #tpu.memory_space<any>>
      %6 = tpu.memref_squeeze %5 : memref<1x128xf32, #tpu.memory_space<any>> -> memref<128xf32, #tpu.memory_space<any>>
      %c0_i32_11 = arith.constant 0 : i32
      %7 = tpu.memref_slice %arg4[%arg6, %c0_i32_11] : memref<16x128xf32, #tpu.memory_space<vmem>> -> memref<1x128xf32, #tpu.memory_space<vmem>>
      %8 = tpu.memref_squeeze %7 : memref<1x128xf32, #tpu.memory_space<vmem>> -> memref<128xf32, #tpu.memory_space<vmem>>
      %9 = tpu.memref_slice %arg5[%arg6] : memref<16x!tpu.dma_semaphore, #tpu.memory_space<semaphore_mem>> -> memref<1x!tpu.dma_semaphore, #tpu.memory_space<semaphore_mem>>
      %10 = tpu.memref_squeeze %9 : memref<1x!tpu.dma_semaphore, #tpu.memory_space<semaphore_mem>> -> memref<!tpu.dma_semaphore, #tpu.memory_space<semaphore_mem>>
      tpu.wait_dma2 semaphore(%10 : memref<!tpu.dma_semaphore, #tpu.memory_space<semaphore_mem>>) src(%6 : memref<128xf32, #tpu.memory_space<any>>) dst(%8 : memref<128xf32, #tpu.memory_space<vmem>>)
    }
    %c16_i32_5 = arith.constant 16 : i32
    %c0 = arith.constant 0 : index
    %c0_6 = arith.constant 0 : index
    %3 = vector.load %arg4[%c0, %c0_6] : memref<16x128xf32, #tpu.memory_space<vmem>>, vector<16x128xf32>
    %c0_7 = arith.constant 0 : index
    %c0_8 = arith.constant 0 : index
    %4 = vector.load %arg3[%c0_7, %c0_8] : memref<16x128xf32, #tpu.memory_space<vmem>>, vector<16x128xf32>
    tpu.vector_store %arg3[%c0_7, %c0_8], %3 {strides = array<i32>} : memref<16x128xf32, #tpu.memory_space<vmem>>, vector<16x128xf32>,
    return
  }
  func.func @transform_1(%arg0: i32, %arg1: memref<16xi32, #tpu.memory_space<smem>>) -> (i32, i32) {
    %c0_i32 = arith.constant 0 : i32
    %c0_i32_0 = arith.constant 0 : i32
    return %arg0, %c0_i32 : i32, i32
  }
}

</mosaic_0001>

<llo_original>
// kernel: tpu_custom_call.1
$region0: #{tpu_custom_call.1}
  #allocation0 [shape = 'u32[]', space=smem, size = 0x4, offset = 0x4, fixed_abs, tag = 'smem constant byte address 0x4 - core index']
  #allocation1 [shape = 'u32[144,128]{1,0:T(1,128)}', space=vmem, size = 0x12000, scoped, tag = 'internal scratch']
  #allocation2 [shape = 'f32[16,128]{1,0:T(8,128)}', space=vmem, size = 0x2000, scoped, tag = 'scratch operand']
  #allocation3 [shape = 's32[16]{0}', space=sflag, size = 0x40, scoped, tag = 'scratch operand']
  #allocation4 [shape = 's32[1]{0}', space=sflag, size = 0x4, scoped, tag = 'scoped memory for tpu_custom_call.1']
  #allocation5 [shape = 'u8[512]{0}', space=smem, size = 0x200, scoped, tag = 'prefetched SMEM operand 0']
  #allocation8 [shape = 's32[]', space=sflag, size = 0x4, offset = 0, fixed_abs, tag = 'sflag constant byte address 0x0 - dummy sync flag']
  #allocation9 [shape = 's32[]', space=sflag, size = 0x4, offset = 0, fixed_abs, tag = 'sflag constant byte address 0x0 - dummy sync flag']
  #allocation10 [shape = 'u32[]', space=smem, size = 0x4, offset = 0x44, fixed_abs, tag = 'smem constant byte address 0x44 - assertion arg 0']
  #allocation11 [shape = 'u32[]', space=smem, size = 0x4, offset = 0x48, fixed_abs, tag = 'smem constant byte address 0x48 - assertion arg 1']
  %s0 = inlined_call_operand.hbm [shape: s32[16], index: 0, kind: input, shape index: {}]
  %s1 = inlined_call_operand.hbm [shape: f32[64,128], index: 1, kind: input, shape index: {}]
  %s2 = inlined_call_operand.hbm [shape: f32[16,128], index: 2, kind: output, shape index: {}]
  %s3 = sld [smem:[#allocation0]]
  $region28: #{tpu_custom_call.1} parent=0
    _
  %s5 = ssub.s32 1, %s3
  %s6 = scalar_select 0, %s5, %s3
  %8 = dma.hbm_to_smem %s0, 16, [#allocation5], [#allocation4]
  %9 = dma.done [#allocation4], 16
  %10 = sfence
  $region1: #{tpu_custom_call.1} parent=0
    #allocation6 [shape = 'u8[8192]{0}', space=vmem, size = 0x2000, scoped, tag = 'output window, operand 0, single buffered']
    #allocation7 [shape = 's32[1]{0}', space=sflag, size = 0x4, scoped, tag = 'scoped memory for tpu_custom_call.1']
    %11 = vsyncpa [#allocation7], 0
    %s12 = smul.u32 0, 16
    loop: start=0, step=1, limit=16
    $region2: #{tpu_custom_call.1} parent=1 // loop_pre_header
      _
    $region3: #{tpu_custom_call.1} parent=1 // loop_header
      %s14 = sphi 0, %s18
      %p15 = scmp.ge.s32.totalorder %s14, 16
    $region4: #{tpu_custom_call.1} parent=1 // loop_header_branch
      %17 = sbr.rel (%p15) target = $region8
    $region5: #{tpu_custom_call.1} parent=1 // loop_body
      %s19 = sadd.s32 %s12, %s14
      %s20 = sld [smem:[#allocation5 + %s19]]
      %s21 = smul.addr %s20, 16
      %s22 = scalar_lea.hbm %s1, %s21
      %s23 = scalar_lea.vmem [#allocation2], %s14
      %s24 = scalar_lea.sflag [#allocation3], %s14
      // Predicated region
      $region9: #{tpu_custom_call.1} parent=5 // pred_check
        _
      $region10: #{tpu_custom_call.1} parent=5 // pred_check_branch
        %26 = sbr.rel target = $region12
      $region11: #{tpu_custom_call.1} parent=5 // pred_region
        %27 = sst [smem:[#allocation10]] [#allocation9]
        %28 = sst [smem:[#allocation11]] [#allocation8]
      $region12: #{tpu_custom_call.1} parent=5 // pred_fallthru
        _
      %30 = shalt.err (0)
      %s32 = sshll.u32 %s23, 4
      %s33 = int_to_ptr.vmem [resolvable:$true] %s32
      %35 = dma.hbm_to_vmem [thread:$0]  %s22, 16, %s33, %s24
    $region6: #{tpu_custom_call.1} parent=1 // loop_footer
      %s18 = sadd.s32 1, %s14
    $region7: #{tpu_custom_call.1} parent=1 // loop_footer_branch
      %13 = sbr.rel target = $region3
    $region8: #{tpu_custom_call.1} parent=1 // loop_exit
      _
    loop: start=0, step=1, limit=16
    $region13: #{tpu_custom_call.1} parent=1 // loop_pre_header
      _
    $region14: #{tpu_custom_call.1} parent=1 // loop_header
      %s37 = sphi 0, %s41
      %p38 = scmp.ge.s32.totalorder %s37, 16
    $region15: #{tpu_custom_call.1} parent=1 // loop_header_branch
      %40 = sbr.rel (%p38) target = $region19
    $region16: #{tpu_custom_call.1} parent=1 // loop_body
      %s42 = scalar_lea.sflag [#allocation3], %s37
      %44 = dma.done %s42, 16
    $region17: #{tpu_custom_call.1} parent=1 // loop_footer
      %s41 = sadd.s32 1, %s37
    $region18: #{tpu_custom_call.1} parent=1 // loop_footer_branch
      %36 = sbr.rel target = $region14
    $region19: #{tpu_custom_call.1} parent=1 // loop_exit
      _
    %v45 = vld [vmem:[#allocation2] sm:$0xff]
    %v46 = vld [vmem:[#allocation2 + $0x8] sm:$0xff]
    %47 = vst [vmem:[#allocation6] sm:$0xff] %v45
    %48 = vst [vmem:[#allocation6 + $0x8] sm:$0xff] %v46
    // Predicated region
    $region20: #{tpu_custom_call.1} parent=1 // pred_check
      _
    $region21: #{tpu_custom_call.1} parent=1 // pred_check_branch
      %50 = sbr.rel (0) target = $region23
    $region22: #{tpu_custom_call.1} parent=1 // pred_region
      %s52 = ssub.s32 256, 256
      %53 = vsyncadd [#allocation7], %s52
      %s54 = sshll.u32 [#allocation6], 4
      %s55 = int_to_ptr.vmem [resolvable:$true] %s54
      %60 = dma.vmem_to_hbm [thread:$0]  %s55, 256, %s2, [#allocation7], 128, 128, 8
    $region23: #{tpu_custom_call.1} parent=1 // pred_fallthru
      _
    // Predicated region
    $region24: #{tpu_custom_call.1} parent=1 // pred_check
      _
    $region25: #{tpu_custom_call.1} parent=1 // pred_check_branch
      %62 = sbr.rel (0) target = $region27
    $region26: #{tpu_custom_call.1} parent=1 // pred_region
      %63 = dma.done [#allocation7], 256
    $region27: #{tpu_custom_call.1} parent=1 // pred_fallthru
      _
    %64 = vsyncpa [#allocation7], 1
  %65 = vsyncmov [#allocation3]
  %s66 = vpop.sfrf %65
  %p67 = scmp.eq.s32.totalorder %s66, 0
  %p68 = pneg %p67
  %70 = shalt.err (%p68)
  %s71 = scalar_lea.sflag [#allocation3], 1
  %72 = vsyncmov %s71
  %s73 = vpop.sfrf %72
  %p74 = scmp.eq.s32.totalorder %s73, 0
  %p75 = pneg %p74
  %77 = shalt.err (%p75)
  %s78 = scalar_lea.sflag [#allocation3], 2
  %79 = vsyncmov %s78
  %s80 = vpop.sfrf %79
  %p81 = scmp.eq.s32.totalorder %s80, 0
  %p82 = pneg %p81
  %84 = shalt.err (%p82)
  %s85 = scalar_lea.sflag [#allocation3], 3
  %86 = vsyncmov %s85
  %s87 = vpop.sfrf %86
  %p88 = scmp.eq.s32.totalorder %s87, 0
  %p89 = pneg %p88
  %91 = shalt.err (%p89)
  %s92 = scalar_lea.sflag [#allocation3], 4
  %93 = vsyncmov %s92
  %s94 = vpop.sfrf %93
  %p95 = scmp.eq.s32.totalorder %s94, 0
  %p96 = pneg %p95
  %98 = shalt.err (%p96)
  %s99 = scalar_lea.sflag [#allocation3], 5
  %100 = vsyncmov %s99
  %s101 = vpop.sfrf %100
  %p102 = scmp.eq.s32.totalorder %s101, 0
  %p103 = pneg %p102
  %105 = shalt.err (%p103)
  %s106 = scalar_lea.sflag [#allocation3], 6
  %107 = vsyncmov %s106
  %s108 = vpop.sfrf %107
  %p109 = scmp.eq.s32.totalorder %s108, 0
  %p110 = pneg %p109
  %112 = shalt.err (%p110)
  %s113 = scalar_lea.sflag [#allocation3], 7
  %114 = vsyncmov %s113
  %s115 = vpop.sfrf %114
  %p116 = scmp.eq.s32.totalorder %s115, 0
  %p117 = pneg %p116
  %119 = shalt.err (%p117)
  %s120 = scalar_lea.sflag [#allocation3], 8
  %121 = vsyncmov %s120
  %s122 = vpop.sfrf %121
  %p123 = scmp.eq.s32.totalorder %s122, 0
  %p124 = pneg %p123
  %126 = shalt.err (%p124)
  %s127 = scalar_lea.sflag [#allocation3], 9
  %128 = vsyncmov %s127
  %s129 = vpop.sfrf %128
  %p130 = scmp.eq.s32.totalorder %s129, 0
  %p131 = pneg %p130
  %133 = shalt.err (%p131)
  %s134 = scalar_lea.sflag [#allocation3], 10
  %135 = vsyncmov %s134
  %s136 = vpop.sfrf %135
  %p137 = scmp.eq.s32.totalorder %s136, 0
  %p138 = pneg %p137
  %140 = shalt.err (%p138)
  %s141 = scalar_lea.sflag [#allocation3], 11
  %142 = vsyncmov %s141
  %s143 = vpop.sfrf %142
  %p144 = scmp.eq.s32.totalorder %s143, 0
  %p145 = pneg %p144
  %147 = shalt.err (%p145)
  %s148 = scalar_lea.sflag [#allocation3], 12
  %149 = vsyncmov %s148
  %s150 = vpop.sfrf %149
  %p151 = scmp.eq.s32.totalorder %s150, 0
  %p152 = pneg %p151
  %154 = shalt.err (%p152)
  %s155 = scalar_lea.sflag [#allocation3], 13
  %156 = vsyncmov %s155
  %s157 = vpop.sfrf %156
  %p158 = scmp.eq.s32.totalorder %s157, 0
  %p159 = pneg %p158
  %161 = shalt.err (%p159)
  %s162 = scalar_lea.sflag [#allocation3], 14
  %163 = vsyncmov %s162
  %s164 = vpop.sfrf %163
  %p165 = scmp.eq.s32.totalorder %s164, 0
  %p166 = pneg %p165
  %168 = shalt.err (%p166)
  %s169 = scalar_lea.sflag [#allocation3], 15
  %170 = vsyncmov %s169
  %s171 = vpop.sfrf %170
  %p172 = scmp.eq.s32.totalorder %s171, 0
  %p173 = pneg %p172
  %175 = shalt.err (%p173)

</llo_original>
